<compile_context>
chip_gen: v7x
topology: tpu7x:2x2x1
jax: 0.10.0
libtpu: 0.0.40
codegen_flags: <defaults>
</compile_context>

<pallas_src>
import functools

import jax
import jax.numpy as jnp
from jax.experimental import pallas as pl
from jax.experimental.pallas import tpu as pltpu

PAD = 128  # lane-dense feature width (vreg lane count)


def _round_up(x, m):
    return (x + m - 1) // m * m


def _pick_tm(n_pad):
    """Row-tile size: 256-multiples fill the v6e/v7x 256x256 MXU, 128 for v5e/small."""
    for tm in (512, 256, 128):
        if n_pad % tm == 0 and n_pad >= tm:
            return tm
    return n_pad


def _vmem_budget(n_pad, tm):
    b2, b4 = 2, 4
    est = (2 * tm * n_pad * b2            # double-buffered A_hat row tiles (bf16)
           + n_pad * PAD * b2             # resident padded X (bf16)
           + 2 * (PAD * PAD * b2 + PAD * b4)   # double-buffered per-layer W / b
           + 2 * tm * PAD * b4            # double-buffered output tile (f32)
           + 2 * n_pad * PAD * b2)        # act + XW scratch (bf16)
    return int(min(64 * 2 ** 20, max(2 * est, 16 * 2 ** 20)))


# ---------------------------------------------------------------------------
# Fused kernel: grid = (layer, node-row tile)
#   layer 0      : x = ReLU(A@ (X W0) + b0)
#   layers 1..L-2: x = ReLU(A@ (x Wl) + bl + x)      (residual skip)
#   layer L-1    : out = A@ (x W) + b                (no act, no skip)
# ---------------------------------------------------------------------------
def _gcn_kernel(a_ref, x_ref, w_ref, b_ref, out_ref, act_ref, xw_ref, *, tm):
    l = pl.program_id(0)
    r = pl.program_id(1)
    n_layer = pl.num_programs(0)

    # Very first step: load padded input features into the activation buffer.
    @pl.when((l == 0) & (r == 0))
    def _():
        act_ref[...] = x_ref[...]

    # Once per layer (first row tile): XW for the whole graph, kept in VMEM.
    @pl.when(r == 0)
    def _():
        xw_ref[...] = jnp.dot(
            act_ref[...], w_ref[0],
            preferred_element_type=jnp.float32).astype(xw_ref.dtype)

    # Row tile: h = A_tile @ XW + b     (f32 MXU accumulation)
    h = jnp.dot(a_ref[...], xw_ref[...],
                preferred_element_type=jnp.float32) + b_ref[0]

    row0 = pl.multiple_of(r * tm, tm)
    prev = act_ref[pl.ds(row0, tm), :].astype(jnp.float32)

    is_first = l == 0
    is_last = l == n_layer - 1
    # in layer: ReLU(h); mid layers: ReLU(h + x_prev); out layer: h.
    # (dropout is identity in eval mode)
    activated = jnp.where(is_first,
                          jnp.maximum(h, 0.0),
                          jnp.maximum(h + prev, 0.0))
    new = jnp.where(is_last, h, activated)

    act_ref[pl.ds(row0, tm), :] = new.astype(act_ref.dtype)
    out_ref[...] = new.astype(out_ref.dtype)


# ---------------------------------------------------------------------------
# Wrappers
# ---------------------------------------------------------------------------
def _pad_mat(m, rows, cols):
    out = jnp.zeros((rows, cols), jnp.float32)
    return out.at[: m.shape[0], : m.shape[1]].set(m.astype(jnp.float32))


def prepare_params(params):
    """One-time lane-dense padding + stacking of all layer weights/biases."""
    ws = [params["in_w"]] + [w for (w, _) in params["mid"]] + [params["out_w"]]
    bs = [params["in_b"]] + [b for (_, b) in params["mid"]] + [params["out_b"]]
    w_stack = jnp.stack([_pad_mat(w, PAD, PAD) for w in ws]).astype(jnp.bfloat16)
    b_stack = jnp.stack([_pad_mat(b.reshape(1, -1), 1, PAD) for b in bs])  # f32
    return {"w": w_stack, "b": b_stack, "n_class": int(params["out_w"].shape[1])}


def gcn_forward(prepped, x, a_hat_pad):
    """GCN inference forward.  Returns (logits[N, n_class], None)."""
    n = x.shape[0]
    n_pad = a_hat_pad.shape[0]
    n_layer = prepped["w"].shape[0]
    tm = _pick_tm(n_pad)
    n_rows = n_pad // tm

    x_pad = _pad_mat(x, n_pad, PAD).astype(jnp.bfloat16)

    out = pl.pallas_call(
        functools.partial(_gcn_kernel, tm=tm),
        out_shape=jax.ShapeDtypeStruct((n_pad, PAD), jnp.float32),
        grid=(n_layer, n_rows),
        in_specs=[
            pl.BlockSpec((tm, n_pad), lambda l, r: (r, 0)),       # A_hat row tiles
            pl.BlockSpec((n_pad, PAD), lambda l, r: (0, 0)),      # X (resident)
            pl.BlockSpec((1, PAD, PAD), lambda l, r: (l, 0, 0)),  # per-layer W
            pl.BlockSpec((1, 1, PAD), lambda l, r: (l, 0, 0)),    # per-layer b
        ],
        out_specs=pl.BlockSpec((tm, PAD), lambda l, r: (r, 0)),
        scratch_shapes=[
            pltpu.VMEM((n_pad, PAD), jnp.bfloat16),  # activation (persists)
            pltpu.VMEM((n_pad, PAD), jnp.bfloat16),  # XW for current layer
        ],
        compiler_params=pltpu.CompilerParams(
            dimension_semantics=("arbitrary", "arbitrary"),
            vmem_limit_bytes=_vmem_budget(n_pad, tm),
        ),
    )(a_hat_pad, x_pad, prepped["w"], prepped["b"])

    return out[:n, : prepped["n_class"]], None


# ---------------------------------------------------------------------------
# JAX glue: normalized adjacency (padded, bf16), parameter init
# ---------------------------------------------------------------------------
def build_norm_adj(edge_index, n):
    """Zero-padded (to 128-multiple) symmetric-normalized adjacency w/ self loops."""
    a = jnp.zeros((n, n), jnp.float32)
    a = a.at[edge_index[0], edge_index[1]].set(1.0)
    a = a.at[jnp.arange(n), jnp.arange(n)].set(1.0)
    deg = a.sum(axis=1)
    d_inv_sqrt = jnp.where(deg > 0, 1.0 / jnp.sqrt(deg), 0.0)
    a_hat = d_inv_sqrt[:, None] * a * d_inv_sqrt[None, :]
    n_pad = _round_up(max(n, 8), PAD)
    return _pad_mat(a_hat, n_pad, n_pad).astype(jnp.bfloat16)


def glorot(key, shape):
    limit = jnp.sqrt(6.0 / (shape[0] + shape[1]))
    return jax.random.uniform(key, shape, jnp.float32, -limit, limit)


def init_params(key, n_feat, n_hid, n_class, n_layer):
    keys = jax.random.split(key, n_layer)
    params = {
        "in_w": glorot(keys[0], (n_feat, n_hid)),
        "in_b": jnp.zeros((n_hid,), jnp.float32),
        "mid": [],
        "out_w": glorot(keys[n_layer - 1], (n_hid, n_class)),
        "out_b": jnp.zeros((n_class,), jnp.float32),
    }
    for l in range(1, n_layer - 1):
        params["mid"].append(
            (glorot(keys[l], (n_hid, n_hid)), jnp.zeros((n_hid,), jnp.float32)))
    return params


# ---------------------------------------------------------------------------
if __name__ == "__main__":
    N_NODES = 64
    N_EDGES = 256
    N_FEAT, N_HID, N_CLASS, N_LAYER = 16, 32, 8, 3

    key = jax.random.PRNGKey(0)
    k_feat, k_edge, k_param = jax.random.split(key, 3)

    x = jax.random.normal(k_feat, (N_NODES, N_FEAT), jnp.float32)
    edge_index = jax.random.randint(k_edge, (2, N_EDGES), 0, N_NODES,
                                    dtype=jnp.int32)

    a_hat_pad = build_norm_adj(edge_index, N_NODES)
    params = init_params(k_param, N_FEAT, N_HID, N_CLASS, N_LAYER)
    prepped = prepare_params(params)          # one-time (hoisted out of forward)

    out, _ = gcn_forward(prepped, x, a_hat_pad)
    out = jax.block_until_ready(out)

    assert out.shape == (N_NODES, N_CLASS)
    assert jnp.all(jnp.isfinite(out))
    print("KERNEL_OK")
</pallas_src>

<mosaic_0001>
module attributes {stable_mosaic.version = 11 : i64} {
  func.func @_gcn_kernel(%arg0: i32, %arg1: i32, %arg2: memref<128x128xbf16, #tpu.memory_space<vmem>>, %arg3: memref<128x128xbf16, #tpu.memory_space<vmem>>, %arg4: memref<1x128x128xbf16, #tpu.memory_space<vmem>>, %arg5: memref<1x1x128xf32, #tpu.memory_space<vmem>>, %arg6: memref<128x128xf32, #tpu.memory_space<vmem>>, %arg7: memref<128x128xbf16, #tpu.memory_space<vmem>>, %arg8: memref<128x128xbf16, #tpu.memory_space<vmem>>) attributes {dimension_semantics = [#tpu.dimension_semantics<arbitrary>, #tpu.dimension_semantics<arbitrary>], iteration_bounds = array<i64: 3, 1>, scalar_prefetch = 0 : i64, scratch_operands = 2 : i64, tpu.core_type = #tpu.core_type<tc>, window_params = [{transform_indices = @transform_0, window_bounds = array<i64: 128, 128>}, {pipeline_mode = #tpu.pipeline_mode<synchronous>, transform_indices = @transform_1, window_bounds = array<i64: 128, 128>}, {transform_indices = @transform_2, window_bounds = array<i64: 1, 128, 128>}, {transform_indices = @transform_3, window_bounds = array<i64: 1, 1, 128>}, {transform_indices = @transform_4, window_bounds = array<i64: 128, 128>}]} {
    %c0_i32 = arith.constant 0 : i32
    %0 = arith.cmpi eq, %arg0, %c0_i32 : i32
    %c0_i32_0 = arith.constant 0 : i32
    %1 = arith.cmpi eq, %arg1, %c0_i32_0 : i32
    %2 = arith.andi %0, %1 : i1
    %3 = arith.extui %2 : i1 to i32
    %c0_i32_1 = arith.constant 0 : i32
    %4 = arith.cmpi ne, %3, %c0_i32_1 : i32
    scf.if %4 {
      %c0_17 = arith.constant 0 : index
      %c0_18 = arith.constant 0 : index
      %33 = vector.load %arg3[%c0_17, %c0_18] : memref<128x128xbf16, #tpu.memory_space<vmem>>, vector<128x128xbf16>
      %c0_19 = arith.constant 0 : index
      %c0_20 = arith.constant 0 : index
      %34 = vector.load %arg7[%c0_19, %c0_20] : memref<128x128xbf16, #tpu.memory_space<vmem>>, vector<128x128xbf16>
      tpu.vector_store %arg7[%c0_19, %c0_20], %33 {strides = array<i32>} : memref<128x128xbf16, #tpu.memory_space<vmem>>, vector<128x128xbf16>,
    } else {
    }
    %c0_i32_2 = arith.constant 0 : i32
    %5 = arith.cmpi eq, %arg1, %c0_i32_2 : i32
    %6 = arith.extui %5 : i1 to i32
    %c0_i32_3 = arith.constant 0 : i32
    %7 = arith.cmpi ne, %6, %c0_i32_3 : i32
    scf.if %7 {
      %c0_17 = arith.constant 0 : index
      %c0_18 = arith.constant 0 : index
      %33 = vector.load %arg7[%c0_17, %c0_18] : memref<128x128xbf16, #tpu.memory_space<vmem>>, vector<128x128xbf16>
      %c0_19 = arith.constant 0 : index
      %c0_20 = arith.constant 0 : index
      %c0_21 = arith.constant 0 : index
      %34 = vector.load %arg4[%c0_19, %c0_20, %c0_21] : memref<1x128x128xbf16, #tpu.memory_space<vmem>>, vector<1x128x128xbf16>
      %35 = vector.shape_cast %34 : vector<1x128x128xbf16> to vector<128x128xbf16>
      %cst_22 = arith.constant dense<0.000000e+00> : vector<128x128xf32>
      %36 = tpu.matmul %33, %35, %cst_22 {dimension_numbers = #tpu.dot_dimension_numbers<[1], [0], [0], [1], [0, 0, 1, 1], [], []>} : vector<128x128xbf16>, vector<128x128xbf16>, vector<128x128xf32> -> vector<128x128xf32>
      %37 = arith.truncf %36 : vector<128x128xf32> to vector<128x128xbf16>
      %c0_23 = arith.constant 0 : index
      %c0_24 = arith.constant 0 : index
      %38 = vector.load %arg8[%c0_23, %c0_24] : memref<128x128xbf16, #tpu.memory_space<vmem>>, vector<128x128xbf16>
      tpu.vector_store %arg8[%c0_23, %c0_24], %37 {strides = array<i32>} : memref<128x128xbf16, #tpu.memory_space<vmem>>, vector<128x128xbf16>,
    } else {
    }
    %c0 = arith.constant 0 : index
    %c0_4 = arith.constant 0 : index
    %8 = vector.load %arg2[%c0, %c0_4] : memref<128x128xbf16, #tpu.memory_space<vmem>>, vector<128x128xbf16>
    %c0_5 = arith.constant 0 : index
    %c0_6 = arith.constant 0 : index
    %9 = vector.load %arg8[%c0_5, %c0_6] : memref<128x128xbf16, #tpu.memory_space<vmem>>, vector<128x128xbf16>
    %cst = arith.constant dense<0.000000e+00> : vector<128x128xf32>
    %10 = tpu.matmul %8, %9, %cst {dimension_numbers = #tpu.dot_dimension_numbers<[1], [0], [0], [1], [0, 0, 1, 1], [], []>} : vector<128x128xbf16>, vector<128x128xbf16>, vector<128x128xf32> -> vector<128x128xf32>
    %c0_7 = arith.constant 0 : index
    %c0_8 = arith.constant 0 : index
    %c0_9 = arith.constant 0 : index
    %11 = vector.load %arg5[%c0_7, %c0_8, %c0_9] : memref<1x1x128xf32, #tpu.memory_space<vmem>>, vector<1x1x128xf32>
    %12 = vector.shape_cast %11 : vector<1x1x128xf32> to vector<1x128xf32>
    %13 = vector.broadcast %12 : vector<1x128xf32> to vector<128x128xf32>
    %14 = arith.addf %10, %13 : vector<128x128xf32>
    %c128_i32 = arith.constant 128 : i32
    %15 = arith.muli %arg1, %c128_i32 : i32
    %16 = tpu.assume_multiple %15, 128 : i32
    %17 = arith.index_cast %16 : i32 to index
    %c0_10 = arith.constant 0 : index
    %18 = vector.load %arg7[%17, %c0_10] : memref<128x128xbf16, #tpu.memory_space<vmem>>, vector<128x128xbf16>
    %19 = arith.extf %18 : vector<128x128xbf16> to vector<128x128xf32>
    %c0_i32_11 = arith.constant 0 : i32
    %20 = arith.cmpi eq, %arg0, %c0_i32_11 : i32
    %c2_i32 = arith.constant 2 : i32
    %21 = arith.cmpi eq, %arg0, %c2_i32 : i32
    %cst_12 = arith.constant 0.000000e+00 : f32
    %22 = vector.broadcast %cst_12 : f32 to vector<128x128xf32>
    %23 = arith.maximumf %14, %22 : vector<128x128xf32>
    %24 = arith.addf %14, %19 : vector<128x128xf32>
    %cst_13 = arith.constant 0.000000e+00 : f32
    %25 = vector.broadcast %cst_13 : f32 to vector<128x128xf32>
    %26 = arith.maximumf %24, %25 : vector<128x128xf32>
    %27 = arith.select %20, %23, %26 : vector<128x128xf32>
    %28 = arith.select %21, %14, %27 : vector<128x128xf32>
    %29 = arith.truncf %28 : vector<128x128xf32> to vector<128x128xbf16>
    %30 = arith.index_cast %16 : i32 to index
    %c0_14 = arith.constant 0 : index
    %31 = vector.load %arg7[%30, %c0_14] : memref<128x128xbf16, #tpu.memory_space<vmem>>, vector<128x128xbf16>
    tpu.vector_store %arg7[%30, %c0_14], %29 {strides = array<i32>} : memref<128x128xbf16, #tpu.memory_space<vmem>>, vector<128x128xbf16>,
    %c0_15 = arith.constant 0 : index
    %c0_16 = arith.constant 0 : index
    %32 = vector.load %arg6[%c0_15, %c0_16] : memref<128x128xf32, #tpu.memory_space<vmem>>, vector<128x128xf32>
    tpu.vector_store %arg6[%c0_15, %c0_16], %28 {strides = array<i32>} : memref<128x128xf32, #tpu.memory_space<vmem>>, vector<128x128xf32>,
    return
  }
  func.func @transform_0(%arg0: i32, %arg1: i32) -> (i32, i32) {
    %c0_i32 = arith.constant 0 : i32
    %c0_i32_0 = arith.constant 0 : i32
    return %arg1, %c0_i32 : i32, i32
  }
  func.func @transform_1(%arg0: i32, %arg1: i32) -> (i32, i32) {
    %c0_i32 = arith.constant 0 : i32
    %c0_i32_0 = arith.constant 0 : i32
    %c0_i32_1 = arith.constant 0 : i32
    return %c0_i32, %c0_i32_0 : i32, i32
  }
  func.func @transform_2(%arg0: i32, %arg1: i32) -> (i32, i32, i32) {
    %c0_i32 = arith.constant 0 : i32
    %c0_i32_0 = arith.constant 0 : i32
    %c0_i32_1 = arith.constant 0 : i32
    return %arg0, %c0_i32, %c0_i32_0 : i32, i32, i32
  }
  func.func @transform_3(%arg0: i32, %arg1: i32) -> (i32, i32, i32) {
    %c0_i32 = arith.constant 0 : i32
    %c0_i32_0 = arith.constant 0 : i32
    %c0_i32_1 = arith.constant 0 : i32
    return %arg0, %c0_i32, %c0_i32_0 : i32, i32, i32
  }
  func.func @transform_4(%arg0: i32, %arg1: i32) -> (i32, i32) {
    %c0_i32 = arith.constant 0 : i32
    %c0_i32_0 = arith.constant 0 : i32
    return %arg1, %c0_i32 : i32, i32
  }
}

</mosaic_0001>

<llo_original>
// kernel: tpu_custom_call.1
$region0: #{tpu_custom_call.1}
  #allocation0 [shape = 'u32[]', space=smem, size = 0x4, offset = 0x4, fixed_abs, tag = 'smem constant byte address 0x4 - core index']
  #allocation1 [shape = 'u32[144,128]{1,0:T(1,128)}', space=vmem, size = 0x12000, scoped, tag = 'internal scratch']
  #allocation2 [shape = 'bf16[128,128]{1,0:T(16,128)(2,1)}', space=vmem, size = 0x8000, scoped, tag = 'scratch operand']
  #allocation3 [shape = 'bf16[128,128]{1,0:T(16,128)(2,1)}', space=vmem, size = 0x8000, scoped, tag = 'scratch operand']
  %s0 = inlined_call_operand.hbm [shape: bf16[128,128], index: 0, kind: input, shape index: {}]
  %s1 = inlined_call_operand.hbm [shape: bf16[128,128], index: 1, kind: input, shape index: {}]
  %s2 = inlined_call_operand.hbm [shape: bf16[3,128,128], index: 2, kind: input, shape index: {}]
  %s3 = inlined_call_operand.vmem [shape: f32[3,1,128], index: 3, kind: input, shape index: {}]
  %s4 = inlined_call_operand.hbm [shape: f32[128,128], index: 4, kind: output, shape index: {}]
  %s5 = sld [smem:[#allocation0]]
  $region69: #{tpu_custom_call.1} parent=0
    _
  %s7 = ssub.s32 1, %s5
  %s8 = scalar_select 0, %s7, %s5
  $region1: #{tpu_custom_call.1} parent=0
    #allocation4 [shape = 'u8[32768]{0}', space=vmem, size = 0x8000, scoped, tag = 'input window, operand 0, single buffered']
    #allocation5 [shape = 's32[2]{0}', space=sflag, size = 0x8, scoped, tag = 'scoped memory for tpu_custom_call.1']
    #allocation6 [shape = 's32[2]{0}', space=sflag, size = 0x8, scoped, tag = 'scoped memory for tpu_custom_call.1']
    #allocation7 [shape = 'u8[32768]{0}', space=vmem, size = 0x8000, scoped, tag = 'input window, operand 1, single buffered']
    #allocation8 [shape = 's32[1]{0}', space=sflag, size = 0x4, scoped, tag = 'scoped memory for tpu_custom_call.1']
    #allocation9 [shape = 'u8[65536]{0}', space=vmem, size = 0x10000, scoped, tag = 'input window, operand 2']
    #allocation10 [shape = 'u8[65536]{0}', space=vmem, size = 0x10000, scoped, tag = 'output window, operand 0, single buffered']
    %9 = vsyncpa [#allocation5], 0
    %10 = vsyncpa [#allocation8], 0
    %11 = vsyncpa [#allocation6], 0
    loop: start=0, step=1, limit=5
    $region2: #{tpu_custom_call.1} parent=1 // loop_pre_header
      _
    $region3: #{tpu_custom_call.1} parent=1 // loop_header
      %s13 = sphi 0, %s17
      %p14 = scmp.ge.s32.totalorder %s13, 5
      %s20 = sphi 0, %s32
      %s21 = sphi 0, %s28
      %s22 = sphi 0, %s20
      %s23 = sphi 0, %s21
      %s24 = sphi 0, %s22
      %s25 = sphi 0, %s23
      %s35 = sphi 0, %s37
      %s38 = sphi 0, %s35
      %s39 = sphi 0, %s38
      %s55 = sphi 0, %s39
      %s59 = sphi 0, %s59
      %s61 = sphi 0, %s59
      %s62 = sphi 0, %s61
      %s76 = sphi 0, %s62
      %s82 = sphi 0, %s84
      %s85 = sphi 0, %s82
      %s86 = sphi 0, %s85
      %s102 = sphi 0, %s86
      %s108 = sphi 0, %s110
      %s111 = sphi 0, %s108
      %s112 = sphi 0, %s111
      %s128 = sphi 0, %s112
      %s134 = sphi 0, %s136
      %s137 = sphi 0, %s134
      %s138 = sphi 0, %s137
      %s154 = sphi 0, %s138
    $region4: #{tpu_custom_call.1} parent=1 // loop_header_branch
      %16 = sbr.rel (%p14) target = $region8
    $region5: #{tpu_custom_call.1} parent=1 // loop_body
      %s18 = ssub.s32 %s13, 1
      %s19 = ssub.s32 %s13, 2
      %s26 = sadd.s32 1, %s21
      %p27 = scmp.ge.s32.totalorder %s26, 1
      %s28 = scalar_select %p27, 0, %s26
      %s29 = sadd.s32 1, %s20
      %s30 = scalar_select %p27, %s29, %s20
      %p31 = scmp.ge.s32.totalorder %s30, 3
      %s32 = scalar_select %p31, 0, %s30
      %s33 = ssub.s32 %s21, %s28
      %p34 = scmp.eq.s32.totalorder %s33, 0
      %s36 = sadd.s32 %s35, 1
      %s37 = scalar_select %p34, %s35, %s36
      %p40 = pneg %p34
      %p41 = scmp.eq.s32.totalorder %s13, 2
      %p42 = por %p40, %p41
      %p43 = scmp.ne.s32.totalorder %s35, %s38
      %p44 = scmp.eq.s32.totalorder %s13, 0
      %p45 = por %p43, %p44
      %p46 = scmp.ne.s32.totalorder %s35, %s38
      %p47 = scmp.eq.s32.totalorder %s18, 2
      %p48 = por %p46, %p47
      %p49 = scmp.ne.s32.totalorder %s38, %s39
      %p50 = scmp.eq.s32.totalorder %s18, 0
      %p51 = por %p49, %p50
      %p52 = scmp.ne.s32.totalorder %s38, %s39
      %p53 = scmp.eq.s32.totalorder %s19, 2
      %p54 = por %p52, %p53
      %p56 = scmp.ne.s32.totalorder %s39, %s55
      %p57 = scmp.eq.s32.totalorder %s19, 0
      %p58 = por %p56, %p57
      %s60 = sadd.s32 %s59, 1
      %p63 = scmp.eq.s32.totalorder %s13, 2
      %p64 = scmp.ne.s32.totalorder %s59, %s61
      %p65 = scmp.eq.s32.totalorder %s13, 0
      %p66 = por %p64, %p65
      %p67 = scmp.ne.s32.totalorder %s59, %s61
      %p68 = scmp.eq.s32.totalorder %s18, 2
      %p69 = por %p67, %p68
      %p70 = scmp.ne.s32.totalorder %s61, %s62
      %p71 = scmp.eq.s32.totalorder %s18, 0
      %p72 = por %p70, %p71
      %p73 = scmp.ne.s32.totalorder %s61, %s62
      %p74 = scmp.eq.s32.totalorder %s19, 2
      %p75 = por %p73, %p74
      %p77 = scmp.ne.s32.totalorder %s62, %s76
      %p78 = scmp.eq.s32.totalorder %s19, 0
      %p79 = por %p77, %p78
      %s80 = ssub.s32 %s20, %s32
      %p81 = scmp.eq.s32.totalorder %s80, 0
      %s83 = sadd.s32 %s82, 1
      %s84 = scalar_select %p81, %s82, %s83
      %p87 = pneg %p81
      %p88 = scmp.eq.s32.totalorder %s13, 2
      %p89 = por %p87, %p88
      %p90 = scmp.ne.s32.totalorder %s82, %s85
      %p91 = scmp.eq.s32.totalorder %s13, 0
      %p92 = por %p90, %p91
      %p93 = scmp.ne.s32.totalorder %s82, %s85
      %p94 = scmp.eq.s32.totalorder %s18, 2
      %p95 = por %p93, %p94
      %p96 = scmp.ne.s32.totalorder %s85, %s86
      %p97 = scmp.eq.s32.totalorder %s18, 0
      %p98 = por %p96, %p97
      %p99 = scmp.ne.s32.totalorder %s85, %s86
      %p100 = scmp.eq.s32.totalorder %s19, 2
      %p101 = por %p99, %p100
      %p103 = scmp.ne.s32.totalorder %s86, %s102
      %p104 = scmp.eq.s32.totalorder %s19, 0
      %p105 = por %p103, %p104
      %s106 = ssub.s32 %s20, %s32
      %p107 = scmp.eq.s32.totalorder %s106, 0
      %s109 = sadd.s32 %s108, 1
      %s110 = scalar_select %p107, %s108, %s109
      %p113 = pneg %p107
      %p114 = scmp.eq.s32.totalorder %s13, 2
      %p115 = por %p113, %p114
      %p116 = scmp.ne.s32.totalorder %s108, %s111
      %p117 = scmp.eq.s32.totalorder %s13, 0
      %p118 = por %p116, %p117
      %p119 = scmp.ne.s32.totalorder %s108, %s111
      %p120 = scmp.eq.s32.totalorder %s18, 2
      %p121 = por %p119, %p120
      %p122 = scmp.ne.s32.totalorder %s111, %s112
      %p123 = scmp.eq.s32.totalorder %s18, 0
      %p124 = por %p122, %p123
      %p125 = scmp.ne.s32.totalorder %s111, %s112
      %p126 = scmp.eq.s32.totalorder %s19, 2
      %p127 = por %p125, %p126
      %p129 = scmp.ne.s32.totalorder %s112, %s128
      %p130 = scmp.eq.s32.totalorder %s19, 0
      %p131 = por %p129, %p130
      %s132 = ssub.s32 %s21, %s28
      %p133 = scmp.eq.s32.totalorder %s132, 0
      %s135 = sadd.s32 %s134, 1
      %s136 = scalar_select %p133, %s134, %s135
      %p139 = pneg %p133
      %p140 = scmp.eq.s32.totalorder %s13, 2
      %p141 = por %p139, %p140
      %p142 = scmp.ne.s32.totalorder %s134, %s137
      %p143 = scmp.eq.s32.totalorder %s13, 0
      %p144 = por %p142, %p143
      %p145 = scmp.ne.s32.totalorder %s134, %s137
      %p146 = scmp.eq.s32.totalorder %s18, 2
      %p147 = por %p145, %p146
      %p148 = scmp.ne.s32.totalorder %s137, %s138
      %p149 = scmp.eq.s32.totalorder %s18, 0
      %p150 = por %p148, %p149
      %p151 = scmp.ne.s32.totalorder %s137, %s138
      %p152 = scmp.eq.s32.totalorder %s19, 2
      %p153 = por %p151, %p152
      %p155 = scmp.ne.s32.totalorder %s138, %s154
      %p156 = scmp.eq.s32.totalorder %s19, 0
      %p157 = por %p155, %p156
      %p158 = scmp.le.s32.totalorder 1, %s13
      %p159 = scmp.lt.s32.totalorder %s13, 4
      %p160 = pnand %p158, %p159
      %p161 = pneg %p160
      // Predicated region
      $region9: #{tpu_custom_call.1} parent=5 // pred_check
        _
      $region10: #{tpu_custom_call.1} parent=5 // pred_check_branch
        %163 = sbr.rel (%p160) target = $region12
      $region11: #{tpu_custom_call.1} parent=5 // pred_region
        %s164 = ssub.s32 %s13, 1
        // Predicated region
        $region13: #{tpu_custom_call.1} parent=11 // pred_check
          %p165 = pneg %p51
        $region14: #{tpu_custom_call.1} parent=11 // pred_check_branch
          %167 = sbr.rel (%p165) target = $region16
        $region15: #{tpu_custom_call.1} parent=11 // pred_region
          %s168 = smul.u32 16, %s23
          %s170 = ssub.s32 1024, 1024
          %171 = vsyncadd [#allocation5], %s170
          %s172 = smul.addr %s168, 64
          %s173 = scalar_lea.hbm %s0, %s172
          %s174 = sshll.u32 [#allocation4], 4
          %s175 = int_to_ptr.vmem [resolvable:$true] %s174
          %180 = dma.hbm_to_vmem [thread:$0]  %s173, 1024, %s175, [#allocation5], 64, 64, 4
        $region16: #{tpu_custom_call.1} parent=11 // pred_fallthru
          _
        // Predicated region
        $region17: #{tpu_custom_call.1} parent=11 // pred_check
          %p181 = pneg %p72
        $region18: #{tpu_custom_call.1} parent=11 // pred_check_branch
          %183 = sbr.rel (%p181) target = $region20
        $region19: #{tpu_custom_call.1} parent=11 // pred_region
          %s185 = ssub.s32 1024, 1024
          %186 = vsyncadd [#allocation8], %s185
          %s187 = sshll.u32 [#allocation7], 4
          %s188 = int_to_ptr.vmem [resolvable:$true] %s187
          %193 = dma.hbm_to_vmem [thread:$0]  %s1, 1024, %s188, [#allocation8], 64, 64, 4
        $region20: #{tpu_custom_call.1} parent=11 // pred_fallthru
          _
      $region12: #{tpu_custom_call.1} parent=5 // pred_fallthru
        _
      %p194 = scmp.lt.s32.totalorder %s13, 3
      // Predicated region
      $region21: #{tpu_custom_call.1} parent=5 // pred_check
        %p195 = pneg %p194
      $region22: #{tpu_custom_call.1} parent=5 // pred_check_branch
        %197 = sbr.rel (%p195) target = $region24
      $region23: #{tpu_custom_call.1} parent=5 // pred_region
        // Predicated region
        $region25: #{tpu_custom_call.1} parent=23 // pred_check
          %p198 = pneg %p92
        $region26: #{tpu_custom_call.1} parent=23 // pred_check_branch
          %200 = sbr.rel (%p198) target = $region28
        $region27: #{tpu_custom_call.1} parent=23 // pred_region
          %s201 = sand.u32 %s13, 1
          %s202 = scalar_lea.sflag [#allocation5], %s201
          %s203 = sand.u32 %s82, 1
          %s204 = smul.addr %s203, 64
          %s205 = scalar_lea.vmem [#allocation9], %s204
          %s207 = ssub.s32 1024, 1024
          %208 = vsyncadd %s202, %s207
          %s209 = smul.addr %s20, 16
          %s210 = smul.addr %s209, 64
          %s211 = scalar_lea.hbm %s2, %s210
          %s212 = sshll.u32 %s205, 4
          %s213 = int_to_ptr.vmem [resolvable:$true] %s212
          %218 = dma.hbm_to_vmem [thread:$0]  %s211, 1024, %s213, %s202, 64, 64, 4
        $region28: #{tpu_custom_call.1} parent=23 // pred_fallthru
          _
        // Predicated region
        $region29: #{tpu_custom_call.1} parent=23 // pred_check
          %p219 = pneg %p118
        $region30: #{tpu_custom_call.1} parent=23 // pred_check_branch
          %221 = sbr.rel (%p219) target = $region32
        $region31: #{tpu_custom_call.1} parent=23 // pred_region
          %p222 = scmp.lt.s32.totalorder %s20, 2
          %s223 = scalar_select %p222, %s20, 2
          %s224 = scalar_lea.vmem %s3, %s223
        $region32: #{tpu_custom_call.1} parent=23 // pred_fallthru
          _
      $region24: #{tpu_custom_call.1} parent=5 // pred_fallthru
        _
      %p225 = scmp.le.s32.totalorder 1, %s13
      %p226 = scmp.lt.s32.totalorder %s13, 4
      %p227 = pnand %p225, %p226
      %p228 = pneg %p227
      // Predicated region
      $region33: #{tpu_custom_call.1} parent=5 // pred_check
        _
      $region34: #{tpu_custom_call.1} parent=5 // pred_check_branch
        %230 = sbr.rel (%p227) target = $region36
      $region35: #{tpu_custom_call.1} parent=5 // pred_region
        %s231 = ssub.s32 %s13, 1
        // Predicated region
        $region37: #{tpu_custom_call.1} parent=35 // pred_check
          %p232 = pneg %p51
        $region38: #{tpu_custom_call.1} parent=35 // pred_check_branch
          %234 = sbr.rel (%p232) target = $region40
        $region39: #{tpu_custom_call.1} parent=35 // pred_region
          %235 = dma.done [#allocation5], 1024
        $region40: #{tpu_custom_call.1} parent=35 // pred_fallthru
          _
        // Predicated region
        $region41: #{tpu_custom_call.1} parent=35 // pred_check
          %p236 = pneg %p72
        $region42: #{tpu_custom_call.1} parent=35 // pred_check_branch
          %238 = sbr.rel (%p236) target = $region44
        $region43: #{tpu_custom_call.1} parent=35 // pred_region
          %239 = dma.done [#allocation8], 1024
        $region44: #{tpu_custom_call.1} parent=35 // pred_fallthru
          _
        %s240 = sand.u32 %s18, 1
        %s241 = scalar_lea.sflag [#allocation5], %s240
        %s242 = sand.u32 %s85, 1
        %s243 = smul.addr %s242, 64
        %s244 = scalar_lea.vmem [#allocation9], %s243
        // Predicated region
        $region45: #{tpu_custom_call.1} parent=35 // pred_check
          %p245 = pneg %p98
        $region46: #{tpu_custom_call.1} parent=35 // pred_check_branch
          %247 = sbr.rel (%p245) target = $region48
        $region47: #{tpu_custom_call.1} parent=35 // pred_region
          %248 = dma.done %s241, 1024
        $region48: #{tpu_custom_call.1} parent=35 // pred_fallthru
          _
        %p249 = pneg %p51
        %p250 = pneg %p48
        %p251 = pneg %p72
        %p252 = pneg %p69
        %s253 = sand.u32 %s18, 1
        %s254 = scalar_lea.sflag [#allocation5], %s253
        %s255 = sand.u32 %s85, 1
        %s256 = smul.addr %s255, 64
        %s257 = scalar_lea.vmem [#allocation9], %s256
        %p258 = pneg %p98
        %p259 = pneg %p95
        %p260 = scmp.lt.s32.totalorder %s22, 2
        %s261 = scalar_select %p260, %s22, 2
        %s262 = scalar_lea.vmem %s3, %s261
        %p263 = pneg %p124
        %p264 = pneg %p121
        %p265 = pneg %p150
        %p266 = pneg %p147
        %s267 = smul.u32 16, %s23
        %p268 = scmp.lt.s32.totalorder %s22, 2
        %s269 = scalar_select %p268, %s22, 2
        %s270 = scalar_lea.vmem %s3, %s269
        %s271 = smul.u32 16, %s23
        %p273 = scmp.eq.s32.totalorder %s22, 0
        %p274 = scmp.eq.s32.totalorder %s23, 0
        %p275 = pnand %p273, %p274
        %p276 = pneg %p275
        // Predicated region
        $region49: #{tpu_custom_call.1} parent=35 // pred_check
          _
        $region50: #{tpu_custom_call.1} parent=35 // pred_check_branch
          %278 = sbr.rel (%p275) target = $region52
        $region51: #{tpu_custom_call.1} parent=35 // pred_region
          %v279 = vld [vmem:[#allocation7] sm:$0xf]
          %v280 = vld [vmem:[#allocation7 + $0x4] sm:$0xf]
          %v281 = vld [vmem:[#allocation7 + $0x8] sm:$0xf]
          %v282 = vld [vmem:[#allocation7 + $0xc] sm:$0xf]
          %v283 = vld [vmem:[#allocation7 + $0x10] sm:$0xf]
          %v284 = vld [vmem:[#allocation7 + $0x14] sm:$0xf]
          %v285 = vld [vmem:[#allocation7 + $0x18] sm:$0xf]
          %v286 = vld [vmem:[#allocation7 + $0x1c] sm:$0xf]
          %v287 = vld [vmem:[#allocation7 + $0x20] sm:$0xf]
          %v288 = vld [vmem:[#allocation7 + $0x24] sm:$0xf]
          %v289 = vld [vmem:[#allocation7 + $0x28] sm:$0xf]
          %v290 = vld [vmem:[#allocation7 + $0x2c] sm:$0xf]
          %v291 = vld [vmem:[#allocation7 + $0x30] sm:$0xf]
          %v292 = vld [vmem:[#allocation7 + $0x34] sm:$0xf]
          %v293 = vld [vmem:[#allocation7 + $0x38] sm:$0xf]
          %v294 = vld [vmem:[#allocation7 + $0x3c] sm:$0xf]
          %v311 = vunpack.c.l.b16 %v279
          %v312 = vunpack.c.l.b16 %v280
          %v313 = vunpack.c.l.b16 %v281
          %v314 = vunpack.c.l.b16 %v282
          %v315 = vunpack.c.l.b16 %v283
          %v316 = vunpack.c.l.b16 %v284
          %v317 = vunpack.c.l.b16 %v285
          %v318 = vunpack.c.l.b16 %v286
          %v319 = vunpack.c.l.b16 %v287
          %v320 = vunpack.c.l.b16 %v288
          %v321 = vunpack.c.l.b16 %v289
          %v322 = vunpack.c.l.b16 %v290
          %v323 = vunpack.c.l.b16 %v291
          %v324 = vunpack.c.l.b16 %v292
          %v325 = vunpack.c.l.b16 %v293
          %v326 = vunpack.c.l.b16 %v294
          %v327 = vpack.c.b16 %v312, %v311
          %v328 = vpack.c.b16 %v314, %v313
          %v329 = vpack.c.b16 %v316, %v315
          %v330 = vpack.c.b16 %v318, %v317
          %v331 = vpack.c.b16 %v320, %v319
          %v332 = vpack.c.b16 %v322, %v321
          %v333 = vpack.c.b16 %v324, %v323
          %v334 = vpack.c.b16 %v326, %v325
          %343 = vst [vmem:[#allocation2] sm:$0xff] %v327
          %344 = vst [vmem:[#allocation2 + $0x8] sm:$0xff] %v328
          %345 = vst [vmem:[#allocation2 + $0x10] sm:$0xff] %v329
          %346 = vst [vmem:[#allocation2 + $0x18] sm:$0xff] %v330
          %347 = vst [vmem:[#allocation2 + $0x20] sm:$0xff] %v331
          %348 = vst [vmem:[#allocation2 + $0x28] sm:$0xff] %v332
          %349 = vst [vmem:[#allocation2 + $0x30] sm:$0xff] %v333
          %350 = vst [vmem:[#allocation2 + $0x38] sm:$0xff] %v334
        $region52: #{tpu_custom_call.1} parent=35 // pred_fallthru
          _
        // Predicated region
        $region53: #{tpu_custom_call.1} parent=35 // pred_check
          %p351 = pneg %p274
        $region54: #{tpu_custom_call.1} parent=35 // pred_check_branch
          %353 = sbr.rel (%p351) target = $region56
        $region55: #{tpu_custom_call.1} parent=35 // pred_region
          %v354 = vld [vmem:[#allocation2] sm:$0xff]
          %v355 = vld [vmem:[#allocation2 + $0x8] sm:$0xff]
          %v356 = vld [vmem:[#allocation2 + $0x10] sm:$0xff]
          %v357 = vld [vmem:[#allocation2 + $0x18] sm:$0xff]
          %v358 = vld [vmem:[#allocation2 + $0x20] sm:$0xff]
          %v359 = vld [vmem:[#allocation2 + $0x28] sm:$0xff]
          %v360 = vld [vmem:[#allocation2 + $0x30] sm:$0xff]
          %v361 = vld [vmem:[#allocation2 + $0x38] sm:$0xff]
          %v362 = vld [vmem:[%s244] sm:$0xf]
          %v363 = vld [vmem:[%s244 + $0x4] sm:$0xf]
          %v364 = vld [vmem:[%s244 + $0x8] sm:$0xf]
          %v365 = vld [vmem:[%s244 + $0xc] sm:$0xf]
          %v366 = vld [vmem:[%s244 + $0x10] sm:$0xf]
          %v367 = vld [vmem:[%s244 + $0x14] sm:$0xf]
          %v368 = vld [vmem:[%s244 + $0x18] sm:$0xf]
          %v369 = vld [vmem:[%s244 + $0x1c] sm:$0xf]
          %v370 = vld [vmem:[%s244 + $0x20] sm:$0xf]
          %v371 = vld [vmem:[%s244 + $0x24] sm:$0xf]
          %v372 = vld [vmem:[%s244 + $0x28] sm:$0xf]
          %v373 = vld [vmem:[%s244 + $0x2c] sm:$0xf]
          %v374 = vld [vmem:[%s244 + $0x30] sm:$0xf]
          %v375 = vld [vmem:[%s244 + $0x34] sm:$0xf]
          %v376 = vld [vmem:[%s244 + $0x38] sm:$0xf]
          %v377 = vld [vmem:[%s244 + $0x3c] sm:$0xf]
          %v394 = vunpack.c.l.b16 %v362
          %v395 = vunpack.c.l.b16 %v363
          %v396 = vunpack.c.l.b16 %v364
          %v397 = vunpack.c.l.b16 %v365
          %v398 = vunpack.c.l.b16 %v366
          %v399 = vunpack.c.l.b16 %v367
          %v400 = vunpack.c.l.b16 %v368
          %v401 = vunpack.c.l.b16 %v369
          %v402 = vunpack.c.l.b16 %v370
          %v403 = vunpack.c.l.b16 %v371
          %v404 = vunpack.c.l.b16 %v372
          %v405 = vunpack.c.l.b16 %v373
          %v406 = vunpack.c.l.b16 %v374
          %v407 = vunpack.c.l.b16 %v375
          %v408 = vunpack.c.l.b16 %v376
          %v409 = vunpack.c.l.b16 %v377
          %v410 = vpack.c.b16 %v395, %v394
          %v411 = vpack.c.b16 %v397, %v396
          %v412 = vpack.c.b16 %v399, %v398
          %v413 = vpack.c.b16 %v401, %v400
          %v414 = vpack.c.b16 %v403, %v402
          %v415 = vpack.c.b16 %v405, %v404
          %v416 = vpack.c.b16 %v407, %v406
          %v417 = vpack.c.b16 %v409, %v408
          %426 = vmatprep.subr.bf16.mxu0 0
          %427 = vmatpush1.bf16.msra.mxu0 %v410
          %428 = vmatprep.subr.bf16.mxu0 0
          %429 = vmatpush1.bf16.msra.mxu0 %v411
          %430 = vmatprep.subr.bf16.mxu0 0
          %431 = vmatpush1.bf16.msra.mxu0 %v412
          %432 = vmatprep.subr.bf16.mxu0 0
          %433 = vmatpush1.bf16.msra.mxu0 %v413
          %434 = vmatprep.subr.bf16.mxu0 0
          %435 = vmatpush1.bf16.msra.mxu0 %v414
          %436 = vmatprep.subr.bf16.mxu0 0
          %437 = vmatpush1.bf16.msra.mxu0 %v415
          %438 = vmatprep.subr.bf16.mxu0 0
          %439 = vmatpush1.bf16.msra.mxu0 %v416
          %440 = vmatprep.subr.bf16.mxu0 0
          %441 = vmatpush1.bf16.msra.mxu0 %v417
          %442 = vmatprep.subr.bf16.mxu0 0
          %443 = vmatpush1.bf16.msra.mxu0 0
          %444 = vmatprep.subr.bf16.mxu0 0
          %445 = vmatpush1.bf16.msra.mxu0 0
          %446 = vmatprep.subr.bf16.mxu0 0
          %447 = vmatpush1.bf16.msra.mxu0 0
          %448 = vmatprep.subr.bf16.mxu0 0
          %449 = vmatpush1.bf16.msra.mxu0 0
          %450 = vmatprep.subr.bf16.mxu0 0
          %451 = vmatpush1.bf16.msra.mxu0 0
          %452 = vmatprep.subr.bf16.mxu0 0
          %453 = vmatpush1.bf16.msra.mxu0 0
          %454 = vmatprep.subr.bf16.mxu0 0
          %455 = vmatpush1.bf16.msra.mxu0 0
          %456 = vmatprep.subr.bf16.mxu0 0
          %457 = vmatpush1.bf16.msra.mxu0 0
          %458 = vmatprep.mubr.bf16.mxu0 0
          %459 = vmatmul.mubr.bf16.gmra.mrb[0].mxu0 %v354
          %v460 = vpop.f32.mrb[0].mxu0
          %v461 = vadd.f32 0.0, %v460
          %v462 = vpop.f32.mrb[0].mxu0
          %v463 = vpop.f32.mrb[0].mxu0
          %v464 = vadd.f32 0.0, %v463
          %v465 = vpop.f32.mrb[0].mxu0
          %466 = vmatprep.mubr.bf16.mxu0 0
          %467 = vmatmul.mubr.bf16.gmra.mrb[0].mxu0 %v355
          %v468 = vpop.f32.mrb[0].mxu0
          %v469 = vadd.f32 0.0, %v468
          %v470 = vpop.f32.mrb[0].mxu0
          %v471 = vpop.f32.mrb[0].mxu0
          %v472 = vadd.f32 0.0, %v471
          %v473 = vpop.f32.mrb[0].mxu0
          %474 = vmatprep.mubr.bf16.mxu0 0
          %475 = vmatmul.mubr.bf16.gmra.mrb[0].mxu0 %v356
          %v476 = vpop.f32.mrb[0].mxu0
          %v477 = vadd.f32 0.0, %v476
          %v478 = vpop.f32.mrb[0].mxu0
          %v479 = vpop.f32.mrb[0].mxu0
          %v480 = vadd.f32 0.0, %v479
          %v481 = vpop.f32.mrb[0].mxu0
          %482 = vmatprep.mubr.bf16.mxu0 0
          %483 = vmatmul.mubr.bf16.gmra.mrb[0].mxu0 %v357
          %v484 = vpop.f32.mrb[0].mxu0
          %v485 = vadd.f32 0.0, %v484
          %v486 = vpop.f32.mrb[0].mxu0
          %v487 = vpop.f32.mrb[0].mxu0
          %v488 = vadd.f32 0.0, %v487
          %v489 = vpop.f32.mrb[0].mxu0
          %490 = vmatprep.mubr.bf16.mxu0 0
          %491 = vmatmul.mubr.bf16.gmra.mrb[0].mxu0 %v358
          %v492 = vpop.f32.mrb[0].mxu0
          %v493 = vadd.f32 0.0, %v492
          %v494 = vpop.f32.mrb[0].mxu0
          %v495 = vpop.f32.mrb[0].mxu0
          %v496 = vadd.f32 0.0, %v495
          %v497 = vpop.f32.mrb[0].mxu0
          %498 = vmatprep.mubr.bf16.mxu0 0
          %499 = vmatmul.mubr.bf16.gmra.mrb[0].mxu0 %v359
          %v500 = vpop.f32.mrb[0].mxu0
          %v501 = vadd.f32 0.0, %v500
          %v502 = vpop.f32.mrb[0].mxu0
          %v503 = vpop.f32.mrb[0].mxu0
          %v504 = vadd.f32 0.0, %v503
          %v505 = vpop.f32.mrb[0].mxu0
          %506 = vmatprep.mubr.bf16.mxu0 0
          %507 = vmatmul.mubr.bf16.gmra.mrb[0].mxu0 %v360
          %v508 = vpop.f32.mrb[0].mxu0
          %v509 = vadd.f32 0.0, %v508
          %v510 = vpop.f32.mrb[0].mxu0
          %v511 = vpop.f32.mrb[0].mxu0
          %v512 = vadd.f32 0.0, %v511
          %v513 = vpop.f32.mrb[0].mxu0
          %514 = vmatprep.mubr.bf16.mxu0 0
          %515 = vmatmul.mubr.bf16.gmra.mrb[0].mxu0 %v361
          %v516 = vpop.f32.mrb[0].mxu0
          %v517 = vadd.f32 0.0, %v516
          %v518 = vpop.f32.mrb[0].mxu0
          %v519 = vpop.f32.mrb[0].mxu0
          %v520 = vadd.f32 0.0, %v519
          %v521 = vpop.f32.mrb[0].mxu0
          %522 = vdwg.mxu0
          %v523 = vpack.c.bf16 %v464, %v461
          %v524 = vpack.c.bf16 %v472, %v469
          %v525 = vpack.c.bf16 %v480, %v477
          %v526 = vpack.c.bf16 %v488, %v485
          %v527 = vpack.c.bf16 %v496, %v493
          %v528 = vpack.c.bf16 %v504, %v501
          %v529 = vpack.c.bf16 %v512, %v509
          %v530 = vpack.c.bf16 %v520, %v517
          %531 = vst [vmem:[#allocation3] sm:$0xff] %v523
          %532 = vst [vmem:[#allocation3 + $0x8] sm:$0xff] %v524
          %533 = vst [vmem:[#allocation3 + $0x10] sm:$0xff] %v525
          %534 = vst [vmem:[#allocation3 + $0x18] sm:$0xff] %v526
          %535 = vst [vmem:[#allocation3 + $0x20] sm:$0xff] %v527
          %536 = vst [vmem:[#allocation3 + $0x28] sm:$0xff] %v528
          %537 = vst [vmem:[#allocation3 + $0x30] sm:$0xff] %v529
          %538 = vst [vmem:[#allocation3 + $0x38] sm:$0xff] %v530
        $region56: #{tpu_custom_call.1} parent=35 // pred_fallthru
          _
        %v539 = vld [vmem:[#allocation4] sm:$0xf]
        %v540 = vld [vmem:[#allocation4 + $0x4] sm:$0xf]
        %v541 = vld [vmem:[#allocation4 + $0x8] sm:$0xf]
        %v542 = vld [vmem:[#allocation4 + $0xc] sm:$0xf]
        %v543 = vld [vmem:[#allocation4 + $0x10] sm:$0xf]
        %v544 = vld [vmem:[#allocation4 + $0x14] sm:$0xf]
        %v545 = vld [vmem:[#allocation4 + $0x18] sm:$0xf]
        %v546 = vld [vmem:[#allocation4 + $0x1c] sm:$0xf]
        %v547 = vld [vmem:[#allocation4 + $0x20] sm:$0xf]
        %v548 = vld [vmem:[#allocation4 + $0x24] sm:$0xf]
        %v549 = vld [vmem:[#allocation4 + $0x28] sm:$0xf]
        %v550 = vld [vmem:[#allocation4 + $0x2c] sm:$0xf]
        %v551 = vld [vmem:[#allocation4 + $0x30] sm:$0xf]
        %v552 = vld [vmem:[#allocation4 + $0x34] sm:$0xf]
        %v553 = vld [vmem:[#allocation4 + $0x38] sm:$0xf]
        %v554 = vld [vmem:[#allocation4 + $0x3c] sm:$0xf]
        %v555 = vld [vmem:[#allocation3] sm:$0xff]
        %v556 = vld [vmem:[#allocation3 + $0x8] sm:$0xff]
        %v557 = vld [vmem:[#allocation3 + $0x10] sm:$0xff]
        %v558 = vld [vmem:[#allocation3 + $0x18] sm:$0xff]
        %v559 = vld [vmem:[#allocation3 + $0x20] sm:$0xff]
        %v560 = vld [vmem:[#allocation3 + $0x28] sm:$0xff]
        %v561 = vld [vmem:[#allocation3 + $0x30] sm:$0xff]
        %v562 = vld [vmem:[#allocation3 + $0x38] sm:$0xff]
        %v563 = vld [vmem:[%s270] sm:$0x1]
        %v565 = vlaneseq
        %v566 = vshrl.u32 %v565, 7
        %v567 = vsub.s32 0, %v566
        %v568 = vrot.slane %v563, %v567
        %v586 = vunpack.c.l.b16 %v539
        %v587 = vunpack.c.l.b16 %v540
        %v588 = vunpack.c.l.b16 %v541
        %v589 = vunpack.c.l.b16 %v542
        %v590 = vunpack.c.l.b16 %v543
        %v591 = vunpack.c.l.b16 %v544
        %v592 = vunpack.c.l.b16 %v545
        %v593 = vunpack.c.l.b16 %v546
        %v594 = vunpack.c.l.b16 %v547
        %v595 = vunpack.c.l.b16 %v548
        %v596 = vunpack.c.l.b16 %v549
        %v597 = vunpack.c.l.b16 %v550
        %v598 = vunpack.c.l.b16 %v551
        %v599 = vunpack.c.l.b16 %v552
        %v600 = vunpack.c.l.b16 %v553
        %v601 = vunpack.c.l.b16 %v554
        %v602 = vpack.c.b16 %v587, %v586
        %v603 = vpack.c.b16 %v589, %v588
        %v604 = vpack.c.b16 %v591, %v590
        %v605 = vpack.c.b16 %v593, %v592
        %v606 = vpack.c.b16 %v595, %v594
        %v607 = vpack.c.b16 %v597, %v596
        %v608 = vpack.c.b16 %v599, %v598
        %v609 = vpack.c.b16 %v601, %v600
        %618 = vmatprep.subr.bf16.mxu0 0
        %619 = vmatpush1.bf16.msra.mxu0 %v555
        %620 = vmatprep.subr.bf16.mxu0 0
        %621 = vmatpush1.bf16.msra.mxu0 %v556
        %622 = vmatprep.subr.bf16.mxu0 0
        %623 = vmatpush1.bf16.msra.mxu0 %v557
        %624 = vmatprep.subr.bf16.mxu0 0
        %625 = vmatpush1.bf16.msra.mxu0 %v558
        %626 = vmatprep.subr.bf16.mxu0 0
        %627 = vmatpush1.bf16.msra.mxu0 %v559
        %628 = vmatprep.subr.bf16.mxu0 0
        %629 = vmatpush1.bf16.msra.mxu0 %v560
        %630 = vmatprep.subr.bf16.mxu0 0
        %631 = vmatpush1.bf16.msra.mxu0 %v561
        %632 = vmatprep.subr.bf16.mxu0 0
        %633 = vmatpush1.bf16.msra.mxu0 %v562
        %634 = vmatprep.subr.bf16.mxu0 0
        %635 = vmatpush1.bf16.msra.mxu0 0
        %636 = vmatprep.subr.bf16.mxu0 0
        %637 = vmatpush1.bf16.msra.mxu0 0
        %638 = vmatprep.subr.bf16.mxu0 0
        %639 = vmatpush1.bf16.msra.mxu0 0
        %640 = vmatprep.subr.bf16.mxu0 0
        %641 = vmatpush1.bf16.msra.mxu0 0
        %642 = vmatprep.subr.bf16.mxu0 0
        %643 = vmatpush1.bf16.msra.mxu0 0
        %644 = vmatprep.subr.bf16.mxu0 0
        %645 = vmatpush1.bf16.msra.mxu0 0
        %646 = vmatprep.subr.bf16.mxu0 0
        %647 = vmatpush1.bf16.msra.mxu0 0
        %648 = vmatprep.subr.bf16.mxu0 0
        %649 = vmatpush1.bf16.msra.mxu0 0
        %650 = vmatprep.mubr.bf16.mxu0 0
        %651 = vmatmul.mubr.bf16.gmra.mrb[0].mxu0 %v602
        %v652 = vpop.f32.mrb[0].mxu0
        %v653 = vadd.f32 %v568, %v652
        %v654 = vpop.f32.mrb[0].mxu0
        %v655 = vpop.f32.mrb[0].mxu0
        %v656 = vadd.f32 %v568, %v655
        %v657 = vpop.f32.mrb[0].mxu0
        %658 = vmatprep.mubr.bf16.mxu0 0
        %659 = vmatmul.mubr.bf16.gmra.mrb[0].mxu0 %v603
        %v660 = vpop.f32.mrb[0].mxu0
        %v661 = vadd.f32 %v568, %v660
        %v662 = vpop.f32.mrb[0].mxu0
        %v663 = vpop.f32.mrb[0].mxu0
        %v664 = vadd.f32 %v568, %v663
        %v665 = vpop.f32.mrb[0].mxu0
        %666 = vmatprep.mubr.bf16.mxu0 0
        %667 = vmatmul.mubr.bf16.gmra.mrb[0].mxu0 %v604
        %v668 = vpop.f32.mrb[0].mxu0
        %v669 = vadd.f32 %v568, %v668
        %v670 = vpop.f32.mrb[0].mxu0
        %v671 = vpop.f32.mrb[0].mxu0
        %v672 = vadd.f32 %v568, %v671
        %v673 = vpop.f32.mrb[0].mxu0
        %674 = vmatprep.mubr.bf16.mxu0 0
        %675 = vmatmul.mubr.bf16.gmra.mrb[0].mxu0 %v605
        %v676 = vpop.f32.mrb[0].mxu0
        %v677 = vadd.f32 %v568, %v676
        %v678 = vpop.f32.mrb[0].mxu0
        %v679 = vpop.f32.mrb[0].mxu0
        %v680 = vadd.f32 %v568, %v679
        %v681 = vpop.f32.mrb[0].mxu0
        %682 = vmatprep.mubr.bf16.mxu0 0
        %683 = vmatmul.mubr.bf16.gmra.mrb[0].mxu0 %v606
        %v684 = vpop.f32.mrb[0].mxu0
        %v685 = vadd.f32 %v568, %v684
        %v686 = vpop.f32.mrb[0].mxu0
        %v687 = vpop.f32.mrb[0].mxu0
        %v688 = vadd.f32 %v568, %v687
        %v689 = vpop.f32.mrb[0].mxu0
        %690 = vmatprep.mubr.bf16.mxu0 0
        %691 = vmatmul.mubr.bf16.gmra.mrb[0].mxu0 %v607
        %v692 = vpop.f32.mrb[0].mxu0
        %v693 = vadd.f32 %v568, %v692
        %v694 = vpop.f32.mrb[0].mxu0
        %v695 = vpop.f32.mrb[0].mxu0
        %v696 = vadd.f32 %v568, %v695
        %v697 = vpop.f32.mrb[0].mxu0
        %698 = vmatprep.mubr.bf16.mxu0 0
        %699 = vmatmul.mubr.bf16.gmra.mrb[0].mxu0 %v608
        %v700 = vpop.f32.mrb[0].mxu0
        %v701 = vadd.f32 %v568, %v700
        %v702 = vpop.f32.mrb[0].mxu0
        %v703 = vpop.f32.mrb[0].mxu0
        %v704 = vadd.f32 %v568, %v703
        %v705 = vpop.f32.mrb[0].mxu0
        %706 = vmatprep.mubr.bf16.mxu0 0
        %707 = vmatmul.mubr.bf16.gmra.mrb[0].mxu0 %v609
        %v708 = vpop.f32.mrb[0].mxu0
        %v709 = vadd.f32 %v568, %v708
        %v710 = vpop.f32.mrb[0].mxu0
        %v711 = vpop.f32.mrb[0].mxu0
        %v712 = vadd.f32 %v568, %v711
        %v713 = vpop.f32.mrb[0].mxu0
        %714 = vdwg.mxu0
        %s715 = smul.u32 %s23, 128
        %s716 = sshra.s32 %s715, 4
        %s717 = sand.u32 %s715, 15
        %s718 = smul.addr %s716, 8
        %s719 = scalar_lea.vmem [#allocation2], %s718
        %v720 = vld [vmem:[%s719] sm:$0xff]
        %v721 = vld [vmem:[%s719 + $0x8] sm:$0xff]
        %v722 = vld [vmem:[%s719 + $0x10] sm:$0xff]
        %v723 = vld [vmem:[%s719 + $0x18] sm:$0xff]
        %v724 = vld [vmem:[%s719 + $0x20] sm:$0xff]
        %v725 = vld [vmem:[%s719 + $0x28] sm:$0xff]
        %v726 = vld [vmem:[%s719 + $0x30] sm:$0xff]
        %v727 = vld [vmem:[%s719 + $0x38] sm:$0xff]
        %v728 = vunpack.c.l.bf16 %v720
        %v729 = vunpack.c.h.bf16 %v720
        %v730 = vunpack.c.l.bf16 %v721
        %v731 = vunpack.c.h.bf16 %v721
        %v732 = vunpack.c.l.bf16 %v722
        %v733 = vunpack.c.h.bf16 %v722
        %v734 = vunpack.c.l.bf16 %v723
        %v735 = vunpack.c.h.bf16 %v723
        %v736 = vunpack.c.l.bf16 %v724
        %v737 = vunpack.c.h.bf16 %v724
        %v738 = vunpack.c.l.bf16 %v725
        %v739 = vunpack.c.h.bf16 %v725
        %v740 = vunpack.c.l.bf16 %v726
        %v741 = vunpack.c.h.bf16 %v726
        %v742 = vunpack.c.l.bf16 %v727
        %v743 = vunpack.c.h.bf16 %v727
        %p744 = scmp.eq.s32.totalorder %s22, 2
        %v745 = vmax.f32 %v653, 0.0
        %v746 = vmax.f32 %v656, 0.0
        %v747 = vmax.f32 %v661, 0.0
        %v748 = vmax.f32 %v664, 0.0
        %v749 = vmax.f32 %v669, 0.0
        %v750 = vmax.f32 %v672, 0.0
        %v751 = vmax.f32 %v677, 0.0
        %v752 = vmax.f32 %v680, 0.0
        %v753 = vmax.f32 %v685, 0.0
        %v754 = vmax.f32 %v688, 0.0
        %v755 = vmax.f32 %v693, 0.0
        %v756 = vmax.f32 %v696, 0.0
        %v757 = vmax.f32 %v701, 0.0
        %v758 = vmax.f32 %v704, 0.0
        %v759 = vmax.f32 %v709, 0.0
        %v760 = vmax.f32 %v712, 0.0
        %v761 = vadd.f32 %v653, %v728
        %v762 = vadd.f32 %v656, %v729
        %v763 = vadd.f32 %v661, %v730
        %v764 = vadd.f32 %v664, %v731
        %v765 = vadd.f32 %v669, %v732
        %v766 = vadd.f32 %v672, %v733
        %v767 = vadd.f32 %v677, %v734
        %v768 = vadd.f32 %v680, %v735
        %v769 = vadd.f32 %v685, %v736
        %v770 = vadd.f32 %v688, %v737
        %v771 = vadd.f32 %v693, %v738
        %v772 = vadd.f32 %v696, %v739
        %v773 = vadd.f32 %v701, %v740
        %v774 = vadd.f32 %v704, %v741
        %v775 = vadd.f32 %v709, %v742
        %v776 = vadd.f32 %v712, %v743
        %v777 = vmax.f32 %v761, 0.0
        %v778 = vmax.f32 %v762, 0.0
        %v779 = vmax.f32 %v763, 0.0
        %v780 = vmax.f32 %v764, 0.0
        %v781 = vmax.f32 %v765, 0.0
        %v782 = vmax.f32 %v766, 0.0
        %v783 = vmax.f32 %v767, 0.0
        %v784 = vmax.f32 %v768, 0.0
        %v785 = vmax.f32 %v769, 0.0
        %v786 = vmax.f32 %v770, 0.0
        %v787 = vmax.f32 %v771, 0.0
        %v788 = vmax.f32 %v772, 0.0
        %v789 = vmax.f32 %v773, 0.0
        %v790 = vmax.f32 %v774, 0.0
        %v791 = vmax.f32 %v775, 0.0
        %v792 = vmax.f32 %v776, 0.0
        %s793 = scalar_select %p273, 1, 0
        %v794 = vstv %s793
        %vm795 = vcmp.eq.s32.totalorder %v794, 1
        %v796 = vsel %vm795, %v745, %v777
        %v797 = vsel %vm795, %v746, %v778
        %v798 = vsel %vm795, %v747, %v779
        %v799 = vsel %vm795, %v748, %v780
        %v800 = vsel %vm795, %v749, %v781
        %v801 = vsel %vm795, %v750, %v782
        %v802 = vsel %vm795, %v751, %v783
        %v803 = vsel %vm795, %v752, %v784
        %v804 = vsel %vm795, %v753, %v785
        %v805 = vsel %vm795, %v754, %v786
        %v806 = vsel %vm795, %v755, %v787
        %v807 = vsel %vm795, %v756, %v788
        %v808 = vsel %vm795, %v757, %v789
        %v809 = vsel %vm795, %v758, %v790
        %v810 = vsel %vm795, %v759, %v791
        %v811 = vsel %vm795, %v760, %v792
        %s812 = scalar_select %p744, 1, 0
        %v813 = vstv %s812
        %vm814 = vcmp.eq.s32.totalorder %v813, 1
        %v815 = vsel %vm814, %v653, %v796
        %v816 = vsel %vm814, %v656, %v797
        %v817 = vsel %vm814, %v661, %v798
        %v818 = vsel %vm814, %v664, %v799
        %v819 = vsel %vm814, %v669, %v800
        %v820 = vsel %vm814, %v672, %v801
        %v821 = vsel %vm814, %v677, %v802
        %v822 = vsel %vm814, %v680, %v803
        %v823 = vsel %vm814, %v685, %v804
        %v824 = vsel %vm814, %v688, %v805
        %v825 = vsel %vm814, %v693, %v806
        %v826 = vsel %vm814, %v696, %v807
        %v827 = vsel %vm814, %v701, %v808
        %v828 = vsel %vm814, %v704, %v809
        %v829 = vsel %vm814, %v709, %v810
        %v830 = vsel %vm814, %v712, %v811
        %v831 = vpack.c.bf16 %v816, %v815
        %v832 = vpack.c.bf16 %v818, %v817
        %v833 = vpack.c.bf16 %v820, %v819
        %v834 = vpack.c.bf16 %v822, %v821
        %v835 = vpack.c.bf16 %v824, %v823
        %v836 = vpack.c.bf16 %v826, %v825
        %v837 = vpack.c.bf16 %v828, %v827
        %v838 = vpack.c.bf16 %v830, %v829
        %839 = vst [vmem:[%s719] sm:$0xff] %v831
        %840 = vst [vmem:[%s719 + $0x8] sm:$0xff] %v832
        %841 = vst [vmem:[%s719 + $0x10] sm:$0xff] %v833
        %842 = vst [vmem:[%s719 + $0x18] sm:$0xff] %v834
        %843 = vst [vmem:[%s719 + $0x20] sm:$0xff] %v835
        %844 = vst [vmem:[%s719 + $0x28] sm:$0xff] %v836
        %845 = vst [vmem:[%s719 + $0x30] sm:$0xff] %v837
        %846 = vst [vmem:[%s719 + $0x38] sm:$0xff] %v838
        %847 = vst [vmem:[#allocation10] sm:$0xff] %v815
        %848 = vst [vmem:[#allocation10 + $0x8] sm:$0xff] %v816
        %849 = vst [vmem:[#allocation10 + $0x10] sm:$0xff] %v817
        %850 = vst [vmem:[#allocation10 + $0x18] sm:$0xff] %v818
        %851 = vst [vmem:[#allocation10 + $0x20] sm:$0xff] %v819
        %852 = vst [vmem:[#allocation10 + $0x28] sm:$0xff] %v820
        %853 = vst [vmem:[#allocation10 + $0x30] sm:$0xff] %v821
        %854 = vst [vmem:[#allocation10 + $0x38] sm:$0xff] %v822
        %855 = vst [vmem:[#allocation10 + $0x40] sm:$0xff] %v823
        %856 = vst [vmem:[#allocation10 + $0x48] sm:$0xff] %v824
        %857 = vst [vmem:[#allocation10 + $0x50] sm:$0xff] %v825
        %858 = vst [vmem:[#allocation10 + $0x58] sm:$0xff] %v826
        %859 = vst [vmem:[#allocation10 + $0x60] sm:$0xff] %v827
        %860 = vst [vmem:[#allocation10 + $0x68] sm:$0xff] %v828
        %861 = vst [vmem:[#allocation10 + $0x70] sm:$0xff] %v829
        %862 = vst [vmem:[#allocation10 + $0x78] sm:$0xff] %v830
        // Predicated region
        $region57: #{tpu_custom_call.1} parent=35 // pred_check
          %p863 = pneg %p147
        $region58: #{tpu_custom_call.1} parent=35 // pred_check_branch
          %865 = sbr.rel (%p863) target = $region60
        $region59: #{tpu_custom_call.1} parent=35 // pred_region
          %s866 = smul.u32 16, %s23
          %s868 = ssub.s32 2048, 2048
          %869 = vsyncadd [#allocation6], %s868
          %s870 = smul.addr %s866, 128
          %s871 = scalar_lea.hbm %s4, %s870
          %s872 = sshll.u32 [#allocation10], 4
          %s873 = int_to_ptr.vmem [resolvable:$true] %s872
          %878 = dma.vmem_to_hbm [thread:$0]  %s873, 2048, %s871, [#allocation6], 128, 128, 8
        $region60: #{tpu_custom_call.1} parent=35 // pred_fallthru
          _
        // Predicated region
        $region61: #{tpu_custom_call.1} parent=35 // pred_check
          %p879 = pneg %p147
        $region62: #{tpu_custom_call.1} parent=35 // pred_check_branch
          %881 = sbr.rel (%p879) target = $region64
        $region63: #{tpu_custom_call.1} parent=35 // pred_region
          %882 = dma.done [#allocation6], 2048
        $region64: #{tpu_custom_call.1} parent=35 // pred_fallthru
          _
      $region36: #{tpu_custom_call.1} parent=5 // pred_fallthru
        _
      %p883 = scmp.le.s32.totalorder 2, %s13
      // Predicated region
      $region65: #{tpu_custom_call.1} parent=5 // pred_check
        %p884 = pneg %p883
      $region66: #{tpu_custom_call.1} parent=5 // pred_check_branch
        %886 = sbr.rel (%p884) target = $region68
      $region67: #{tpu_custom_call.1} parent=5 // pred_region
        %s887 = ssub.s32 %s13, 2
      $region68: #{tpu_custom_call.1} parent=5 // pred_fallthru
        _
    $region6: #{tpu_custom_call.1} parent=1 // loop_footer
      %s17 = sadd.s32 1, %s13
    $region7: #{tpu_custom_call.1} parent=1 // loop_footer_branch
      %12 = sbr.rel target = $region3
    $region8: #{tpu_custom_call.1} parent=1 // loop_exit
      _
    %888 = vsyncpa [#allocation5], 1
    %s889 = scalar_lea.sflag [#allocation5], 1
    %890 = vsyncpa %s889, 1
    %891 = vsyncpa [#allocation8], 1
    %892 = vsyncpa [#allocation6], 1
    %s893 = scalar_lea.sflag [#allocation6], 1
    %894 = vsyncpa %s893, 1

</llo_original>
